<compile_context>
chip_gen: v7x
topology: tpu7x:2x2x1
jax: 0.10.0
libtpu: 0.0.40
codegen_flags: <defaults>
</compile_context>

<pallas_src>
import functools

import jax
import jax.numpy as jnp
from jax.experimental import pallas as pl
from jax.experimental.pallas import tpu as pltpu


def _round_up(x, m):
    return (x + m - 1) // m * m


def _grpo_loss_kernel(lp_ref, old_ref, ref_ref, adv_ref, mask_ref,
                      loss_ref, kl_ref, *, clip_eps, kl_weight, inv_batch):
    @pl.when(pl.program_id(0) == 0)
    def _init():
        loss_ref[...] = jnp.zeros_like(loss_ref)
        kl_ref[...] = jnp.zeros_like(kl_ref)

    lp = lp_ref[...].astype(jnp.float32)
    old = old_ref[...].astype(jnp.float32)
    lref = ref_ref[...].astype(jnp.float32)
    mask = mask_ref[...].astype(jnp.float32)
    adv = adv_ref[...].astype(jnp.float32)      # (tb, 1) or (tb, T); broadcasts

    # k3 KL estimator; mask applied to log_ratio as in the torch reference.
    log_ratio = (lref - lp) * mask
    kl = jnp.exp(log_ratio) - log_ratio - 1.0
    kl_m = kl * mask                            # computed once, reused twice

    # PPO clipped surrogate.
    ratio = jnp.exp(lp - old)
    surr1 = ratio * adv
    surr2 = jnp.clip(ratio, 1.0 - clip_eps, 1.0 + clip_eps) * adv
    pg_m = -jnp.minimum(surr1, surr2) * mask

    # Masked per-row means (exact divide to hold the 1e-5 tolerance).
    inv_row = 1.0 / (jnp.sum(mask, axis=-1, keepdims=True) + 1e-10)   # (tb, 1)
    kl_sum = jnp.sum(kl_m, axis=-1, keepdims=True)                    # (tb, 1)
    pg_sum = jnp.sum(pg_m, axis=-1, keepdims=True)                    # (tb, 1)

    kl_row = kl_sum * inv_row
    loss_row = (pg_sum + kl_weight * kl_sum) * inv_row

    # Accumulate the mean over batch (padded rows have zero mask -> contribute 0).
    loss_ref[...] += jnp.sum(loss_row, axis=0, keepdims=True) * inv_batch
    kl_ref[...] += jnp.sum(kl_row, axis=0, keepdims=True) * inv_batch


def grpo_loss(log_probs, old_log_probs, log_probs_ref, advantages, action_mask,
              *, clip_eps: float = 0.2, kl_weight: float = 0.01):
    B, T = log_probs.shape
    if advantages.ndim == 1:
        advantages = advantages[:, None]          # [B] -> [B, 1]
    if action_mask.dtype == jnp.bool_:
        action_mask = action_mask.astype(jnp.int8)  # stay narrow (1 byte/elem)

    # ---- pick a batch tile (multiple of 32, or the full padded batch) ----
    adv_row_bytes = advantages.shape[-1] * advantages.dtype.itemsize
    bytes_per_row = 2 * (T * (log_probs.dtype.itemsize
                              + old_log_probs.dtype.itemsize
                              + log_probs_ref.dtype.itemsize
                              + action_mask.dtype.itemsize) + adv_row_bytes)
    budget = 12 * 1024 * 1024                      # double-buffered input tiles
    max_rows = max(32, (budget // max(bytes_per_row, 1)) // 32 * 32)

    tile_b = None
    for cand in (512, 256, 128, 64, 32):
        if cand <= max_rows and B % cand == 0:
            tile_b = cand
            break
    if tile_b is None:
        full = _round_up(B, 8)
        if full * bytes_per_row <= budget:
            tile_b = full                          # single full-batch block
        else:
            tile_b = min(256, max_rows)            # multiple of 32, pad B up
    B_pad = _round_up(B, tile_b)

    if B_pad != B:
        rows = B_pad - B
        pad2 = ((0, rows), (0, 0))
        log_probs = jnp.pad(log_probs, pad2)
        old_log_probs = jnp.pad(old_log_probs, pad2)
        log_probs_ref = jnp.pad(log_probs_ref, pad2)
        advantages = jnp.pad(advantages, pad2)
        action_mask = jnp.pad(action_mask, pad2)

    grid_b = B_pad // tile_b
    adv_cols = advantages.shape[-1]                # 1 or T

    kernel = functools.partial(_grpo_loss_kernel,
                               clip_eps=float(clip_eps),
                               kl_weight=float(kl_weight),
                               inv_batch=1.0 / float(B))

    row_spec = pl.BlockSpec((tile_b, T), lambda i: (i, 0))
    adv_spec = pl.BlockSpec((tile_b, adv_cols), lambda i: (i, 0))
    out_spec = pl.BlockSpec((1, 1), lambda i: (0, 0))

    # VMEM budget: double-buffered input tiles + headroom for f32 intermediates.
    itemsize_sum = (log_probs.dtype.itemsize + old_log_probs.dtype.itemsize
                    + log_probs_ref.dtype.itemsize + action_mask.dtype.itemsize)
    est = 2 * tile_b * T * itemsize_sum + 12 * tile_b * T * 4 + (1 << 20)
    vmem_limit = int(min(56 * 1024 * 1024, max(est, 16 * 1024 * 1024)))

    loss, kl = pl.pallas_call(
        kernel,
        grid=(grid_b,),
        in_specs=[row_spec, row_spec, row_spec, adv_spec, row_spec],
        out_specs=(out_spec, out_spec),
        out_shape=(jax.ShapeDtypeStruct((1, 1), jnp.float32),
                   jax.ShapeDtypeStruct((1, 1), jnp.float32)),
        compiler_params=pltpu.CompilerParams(
            dimension_semantics=("arbitrary",),
            vmem_limit_bytes=vmem_limit),
    )(log_probs, old_log_probs, log_probs_ref, advantages, action_mask)
    return loss[0, 0], kl[0, 0]


def _grpo_loss_ref(log_probs, old_log_probs, log_probs_ref, advantages,
                   action_mask, *, clip_eps, kl_weight):
    # pure-JAX reference mirroring the PyTorch module
    lp = log_probs.astype(jnp.float32)
    old = old_log_probs.astype(jnp.float32)
    lref = log_probs_ref.astype(jnp.float32)
    mask = action_mask.astype(jnp.float32)
    adv = jnp.broadcast_to(advantages, lp.shape).astype(jnp.float32)

    log_ratio = (lref - lp) * mask
    kl = jnp.exp(log_ratio) - log_ratio - 1.0
    ratio = jnp.exp(lp - old)
    surr1 = ratio * adv
    surr2 = jnp.clip(ratio, 1.0 - clip_eps, 1.0 + clip_eps) * adv
    loss = -jnp.minimum(surr1, surr2) + kl_weight * kl

    def masked_mean(t):
        return (t * mask).sum(-1) / (mask.sum(-1) + 1e-10)

    return masked_mean(loss).mean(), masked_mean(kl).mean()


if __name__ == "__main__":
    clip_eps, kl_weight = 0.2, 0.01
    key = jax.random.PRNGKey(0)

    # ---- Case 1: tiny shape, f32 inputs, [B, 1] advantages, bool mask ----
    B, T = 2, 8
    k1, k2, k3, k4, k5 = jax.random.split(key, 5)
    log_probs = -jnp.abs(jax.random.normal(k1, (B, T), jnp.float32)) - 0.1
    old_log_probs = log_probs + 0.1 * jax.random.normal(k2, (B, T), jnp.float32)
    log_probs_ref = log_probs + 0.1 * jax.random.normal(k3, (B, T), jnp.float32)
    advantages = jax.random.normal(k4, (B, 1), jnp.float32)
    action_mask = jax.random.uniform(k5, (B, T)) > 0.25          # bool, stays narrow

    loss, kl = grpo_loss(log_probs, old_log_probs, log_probs_ref, advantages,
                         action_mask, clip_eps=clip_eps, kl_weight=kl_weight)
    jax.block_until_ready((loss, kl))
    loss_r, kl_r = _grpo_loss_ref(log_probs, old_log_probs, log_probs_ref,
                                  advantages, action_mask,
                                  clip_eps=clip_eps, kl_weight=kl_weight)
    assert jnp.allclose(loss, loss_r, atol=1e-5, rtol=1e-5), (loss, loss_r)
    assert jnp.allclose(kl, kl_r, atol=1e-5, rtol=1e-5), (kl, kl_r)

    # ---- Case 2: multi-tile grid (B=96 -> three (32, T) tiles), bf16 inputs ----
    B, T = 96, 128
    k1, k2, k3, k4, k5 = jax.random.split(jax.random.PRNGKey(1), 5)
    lp2 = (-jnp.abs(jax.random.normal(k1, (B, T), jnp.float32)) - 0.1).astype(jnp.bfloat16)
    old2 = (lp2.astype(jnp.float32)
            + 0.1 * jax.random.normal(k2, (B, T), jnp.float32)).astype(jnp.bfloat16)
    ref2 = (lp2.astype(jnp.float32)
            + 0.1 * jax.random.normal(k3, (B, T), jnp.float32)).astype(jnp.bfloat16)
    adv2 = jax.random.normal(k4, (B, 1), jnp.float32)
    mask2 = jax.random.uniform(k5, (B, T)) > 0.25

    loss2, kl2 = grpo_loss(lp2, old2, ref2, adv2, mask2,
                           clip_eps=clip_eps, kl_weight=kl_weight)
    jax.block_until_ready((loss2, kl2))
    loss2_r, kl2_r = _grpo_loss_ref(lp2, old2, ref2, adv2, mask2,
                                    clip_eps=clip_eps, kl_weight=kl_weight)
    assert jnp.allclose(loss2, loss2_r, atol=2e-5, rtol=1e-4), (loss2, loss2_r)
    assert jnp.allclose(kl2, kl2_r, atol=2e-5, rtol=1e-4), (kl2, kl2_r)

    print("KERNEL_OK")
</pallas_src>

<mosaic_0001>
module attributes {stable_mosaic.version = 11 : i64} {
  func.func @_grpo_loss_kernel(%arg0: i32, %arg1: memref<8x8xf32, #tpu.memory_space<vmem>>, %arg2: memref<8x8xf32, #tpu.memory_space<vmem>>, %arg3: memref<8x8xf32, #tpu.memory_space<vmem>>, %arg4: memref<8x1xf32, #tpu.memory_space<vmem>>, %arg5: memref<8x8xi8, #tpu.memory_space<vmem>>, %arg6: memref<1x1xf32, #tpu.memory_space<vmem>>, %arg7: memref<1x1xf32, #tpu.memory_space<vmem>>) attributes {dimension_semantics = [#tpu.dimension_semantics<arbitrary>], iteration_bounds = array<i64: 1>, scalar_prefetch = 0 : i64, scratch_operands = 0 : i64, tpu.core_type = #tpu.core_type<tc>, window_params = [{transform_indices = @transform_0, window_bounds = array<i64: 8, 8>}, {transform_indices = @transform_1, window_bounds = array<i64: 8, 8>}, {transform_indices = @transform_2, window_bounds = array<i64: 8, 8>}, {transform_indices = @transform_3, window_bounds = array<i64: 8, 1>}, {transform_indices = @transform_4, window_bounds = array<i64: 8, 8>}, {pipeline_mode = #tpu.pipeline_mode<synchronous>, transform_indices = @transform_5, window_bounds = array<i64: 1, 1>}, {pipeline_mode = #tpu.pipeline_mode<synchronous>, transform_indices = @transform_6, window_bounds = array<i64: 1, 1>}]} {
    %c0_i32 = arith.constant 0 : i32
    %0 = arith.cmpi eq, %arg0, %c0_i32 : i32
    %1 = arith.extui %0 : i1 to i32
    %c0_i32_0 = arith.constant 0 : i32
    %2 = arith.cmpi ne, %1, %c0_i32_0 : i32
    scf.if %2 {
      %cst_31 = arith.constant 0.000000e+00 : f32
      %59 = vector.broadcast %cst_31 : f32 to vector<1x1xf32>
      %c0_32 = arith.constant 0 : index
      %c0_33 = arith.constant 0 : index
      %60 = vector.load %arg6[%c0_32, %c0_33] : memref<1x1xf32, #tpu.memory_space<vmem>>, vector<1x1xf32>
      tpu.vector_store %arg6[%c0_32, %c0_33], %59 {strides = array<i32>} : memref<1x1xf32, #tpu.memory_space<vmem>>, vector<1x1xf32>,
      %cst_34 = arith.constant 0.000000e+00 : f32
      %61 = vector.broadcast %cst_34 : f32 to vector<1x1xf32>
      %c0_35 = arith.constant 0 : index
      %c0_36 = arith.constant 0 : index
      %62 = vector.load %arg7[%c0_35, %c0_36] : memref<1x1xf32, #tpu.memory_space<vmem>>, vector<1x1xf32>
      tpu.vector_store %arg7[%c0_35, %c0_36], %61 {strides = array<i32>} : memref<1x1xf32, #tpu.memory_space<vmem>>, vector<1x1xf32>,
    } else {
    }
    %c0 = arith.constant 0 : index
    %c0_1 = arith.constant 0 : index
    %3 = vector.load %arg1[%c0, %c0_1] : memref<8x8xf32, #tpu.memory_space<vmem>>, vector<8x8xf32>
    %c0_2 = arith.constant 0 : index
    %c0_3 = arith.constant 0 : index
    %4 = vector.load %arg2[%c0_2, %c0_3] : memref<8x8xf32, #tpu.memory_space<vmem>>, vector<8x8xf32>
    %c0_4 = arith.constant 0 : index
    %c0_5 = arith.constant 0 : index
    %5 = vector.load %arg3[%c0_4, %c0_5] : memref<8x8xf32, #tpu.memory_space<vmem>>, vector<8x8xf32>
    %c0_6 = arith.constant 0 : index
    %c0_7 = arith.constant 0 : index
    %6 = vector.load %arg5[%c0_6, %c0_7] : memref<8x8xi8, #tpu.memory_space<vmem>>, vector<8x8xi8>
    %7 = arith.sitofp %6 : vector<8x8xi8> to vector<8x8xf32>
    %c0_8 = arith.constant 0 : index
    %c0_9 = arith.constant 0 : index
    %8 = vector.load %arg4[%c0_8, %c0_9] : memref<8x1xf32, #tpu.memory_space<vmem>>, vector<8x1xf32>
    %9 = arith.subf %5, %3 : vector<8x8xf32>
    %10 = arith.mulf %9, %7 : vector<8x8xf32>
    %11 = math.exp %10 : vector<8x8xf32>
    %12 = arith.subf %11, %10 : vector<8x8xf32>
    %cst = arith.constant 1.000000e+00 : f32
    %13 = vector.broadcast %cst : f32 to vector<8x8xf32>
    %14 = arith.subf %12, %13 : vector<8x8xf32>
    %15 = arith.mulf %14, %7 : vector<8x8xf32>
    %16 = arith.subf %3, %4 : vector<8x8xf32>
    %17 = math.exp %16 : vector<8x8xf32>
    %18 = vector.broadcast %8 : vector<8x1xf32> to vector<8x8xf32>
    %19 = arith.mulf %17, %18 : vector<8x8xf32>
    %cst_10 = arith.constant 8.000000e-01 : f32
    %cst_11 = arith.constant 1.200000e+00 : f32
    %20 = vector.broadcast %cst_10 : f32 to vector<8x8xf32>
    %21 = arith.maximumf %20, %17 : vector<8x8xf32>
    %22 = vector.broadcast %cst_11 : f32 to vector<8x8xf32>
    %23 = arith.minimumf %22, %21 : vector<8x8xf32>
    %24 = vector.broadcast %8 : vector<8x1xf32> to vector<8x8xf32>
    %25 = arith.mulf %23, %24 : vector<8x8xf32>
    %26 = arith.minimumf %19, %25 : vector<8x8xf32>
    %cst_12 = arith.constant 0.000000e+00 : f32
    %27 = vector.broadcast %cst_12 : f32 to vector<8x8xf32>
    %28 = arith.subf %27, %26 : vector<8x8xf32>
    %29 = arith.mulf %28, %7 : vector<8x8xf32>
    %cst_13 = arith.constant dense<0.000000e+00> : vector<8xf32>
    %30 = vector.multi_reduction <add>, %7, %cst_13 [1] : vector<8x8xf32> to vector<8xf32>
    %31 = vector.shape_cast %30 : vector<8xf32> to vector<8x1xf32>
    %cst_14 = arith.constant 1.000000e-10 : f32
    %32 = vector.broadcast %cst_14 : f32 to vector<8x1xf32>
    %33 = arith.addf %31, %32 : vector<8x1xf32>
    %cst_15 = arith.constant 1.000000e+00 : f32
    %34 = vector.broadcast %cst_15 : f32 to vector<8x1xf32>
    %35 = arith.divf %34, %33 : vector<8x1xf32>
    %cst_16 = arith.constant dense<0.000000e+00> : vector<8xf32>
    %36 = vector.multi_reduction <add>, %15, %cst_16 [1] : vector<8x8xf32> to vector<8xf32>
    %37 = vector.shape_cast %36 : vector<8xf32> to vector<8x1xf32>
    %cst_17 = arith.constant dense<0.000000e+00> : vector<8xf32>
    %38 = vector.multi_reduction <add>, %29, %cst_17 [1] : vector<8x8xf32> to vector<8xf32>
    %39 = vector.shape_cast %38 : vector<8xf32> to vector<8x1xf32>
    %40 = arith.mulf %37, %35 : vector<8x1xf32>
    %cst_18 = arith.constant 0.00999999977 : f32
    %41 = vector.broadcast %cst_18 : f32 to vector<8x1xf32>
    %42 = arith.mulf %41, %37 : vector<8x1xf32>
    %43 = arith.addf %39, %42 : vector<8x1xf32>
    %44 = arith.mulf %43, %35 : vector<8x1xf32>
    %c0_19 = arith.constant 0 : index
    %c0_20 = arith.constant 0 : index
    %45 = vector.load %arg6[%c0_19, %c0_20] : memref<1x1xf32, #tpu.memory_space<vmem>>, vector<1x1xf32>
    %cst_21 = arith.constant dense<0.000000e+00> : vector<1xf32>
    %46 = vector.multi_reduction <add>, %44, %cst_21 [0] : vector<8x1xf32> to vector<1xf32>
    %47 = vector.shape_cast %46 : vector<1xf32> to vector<1x1xf32>
    %cst_22 = arith.constant 5.000000e-01 : f32
    %48 = vector.broadcast %cst_22 : f32 to vector<1x1xf32>
    %49 = arith.mulf %47, %48 : vector<1x1xf32>
    %50 = arith.addf %45, %49 : vector<1x1xf32>
    %c0_23 = arith.constant 0 : index
    %c0_24 = arith.constant 0 : index
    %51 = vector.load %arg6[%c0_23, %c0_24] : memref<1x1xf32, #tpu.memory_space<vmem>>, vector<1x1xf32>
    tpu.vector_store %arg6[%c0_23, %c0_24], %50 {strides = array<i32>} : memref<1x1xf32, #tpu.memory_space<vmem>>, vector<1x1xf32>,
    %c0_25 = arith.constant 0 : index
    %c0_26 = arith.constant 0 : index
    %52 = vector.load %arg7[%c0_25, %c0_26] : memref<1x1xf32, #tpu.memory_space<vmem>>, vector<1x1xf32>
    %cst_27 = arith.constant dense<0.000000e+00> : vector<1xf32>
    %53 = vector.multi_reduction <add>, %40, %cst_27 [0] : vector<8x1xf32> to vector<1xf32>
    %54 = vector.shape_cast %53 : vector<1xf32> to vector<1x1xf32>
    %cst_28 = arith.constant 5.000000e-01 : f32
    %55 = vector.broadcast %cst_28 : f32 to vector<1x1xf32>
    %56 = arith.mulf %54, %55 : vector<1x1xf32>
    %57 = arith.addf %52, %56 : vector<1x1xf32>
    %c0_29 = arith.constant 0 : index
    %c0_30 = arith.constant 0 : index
    %58 = vector.load %arg7[%c0_29, %c0_30] : memref<1x1xf32, #tpu.memory_space<vmem>>, vector<1x1xf32>
    tpu.vector_store %arg7[%c0_29, %c0_30], %57 {strides = array<i32>} : memref<1x1xf32, #tpu.memory_space<vmem>>, vector<1x1xf32>,
    return
  }
  func.func @transform_0(%arg0: i32) -> (i32, i32) {
    %c0_i32 = arith.constant 0 : i32
    %c0_i32_0 = arith.constant 0 : i32
    return %arg0, %c0_i32 : i32, i32
  }
  func.func @transform_1(%arg0: i32) -> (i32, i32) {
    %c0_i32 = arith.constant 0 : i32
    %c0_i32_0 = arith.constant 0 : i32
    return %arg0, %c0_i32 : i32, i32
  }
  func.func @transform_2(%arg0: i32) -> (i32, i32) {
    %c0_i32 = arith.constant 0 : i32
    %c0_i32_0 = arith.constant 0 : i32
    return %arg0, %c0_i32 : i32, i32
  }
  func.func @transform_3(%arg0: i32) -> (i32, i32) {
    %c0_i32 = arith.constant 0 : i32
    %c0_i32_0 = arith.constant 0 : i32
    return %arg0, %c0_i32 : i32, i32
  }
  func.func @transform_4(%arg0: i32) -> (i32, i32) {
    %c0_i32 = arith.constant 0 : i32
    %c0_i32_0 = arith.constant 0 : i32
    return %arg0, %c0_i32 : i32, i32
  }
  func.func @transform_5(%arg0: i32) -> (i32, i32) {
    %c0_i32 = arith.constant 0 : i32
    %c0_i32_0 = arith.constant 0 : i32
    %c0_i32_1 = arith.constant 0 : i32
    return %c0_i32, %c0_i32_0 : i32, i32
  }
  func.func @transform_6(%arg0: i32) -> (i32, i32) {
    %c0_i32 = arith.constant 0 : i32
    %c0_i32_0 = arith.constant 0 : i32
    %c0_i32_1 = arith.constant 0 : i32
    return %c0_i32, %c0_i32_0 : i32, i32
  }
}

</mosaic_0001>

<llo_original>
// kernel: tpu_custom_call.1
$region0: #{tpu_custom_call.1}
  #allocation0 [shape = 'u32[]', space=smem, size = 0x4, offset = 0x4, fixed_abs, tag = 'smem constant byte address 0x4 - core index']
  #allocation1 [shape = 'u32[144,128]{1,0:T(1,128)}', space=vmem, size = 0x12000, scoped, tag = 'internal scratch']
  %s0 = inlined_call_operand.vmem [shape: f32[8,8], index: 0, kind: input, shape index: {}]
  %s1 = inlined_call_operand.hbm [shape: f32[8,8], index: 1, kind: input, shape index: {}]
  %s2 = inlined_call_operand.vmem [shape: f32[8,8], index: 2, kind: input, shape index: {}]
  %s3 = inlined_call_operand.vmem [shape: f32[8,1], index: 3, kind: input, shape index: {}]
  %s4 = inlined_call_operand.vmem [shape: s8[8,8], index: 4, kind: input, shape index: {}]
  %s5 = inlined_call_operand.hbm [shape: f32[1,1], index: 5, kind: output, shape index: {0}]
  %s6 = inlined_call_operand.hbm [shape: f32[1,1], index: 6, kind: output, shape index: {1}]
  %7 = xla_tuple %s5, %s6
  %s8 = sld [smem:[#allocation0]]
  $region46: #{tpu_custom_call.1} parent=0
    _
  %s10 = ssub.s32 1, %s8
  %s11 = scalar_select 0, %s10, %s8
  $region1: #{tpu_custom_call.1} parent=0
    #allocation2 [shape = 'u8[4096]{0}', space=vmem, size = 0x1000, scoped, tag = 'input window, operand 1, single buffered']
    #allocation3 [shape = 's32[1]{0}', space=sflag, size = 0x4, scoped, tag = 'scoped memory for tpu_custom_call.1']
    #allocation4 [shape = 's32[1]{0}', space=sflag, size = 0x4, scoped, tag = 'scoped memory for tpu_custom_call.1']
    #allocation5 [shape = 'u8[512]{0}', space=vmem, size = 0x400, scoped, tag = 'output window, operand 0, single buffered']
    #allocation6 [shape = 'u8[512]{0}', space=vmem, size = 0x400, scoped, tag = 'output window, operand 1, single buffered']
    #allocation7 [shape = 's32[1]{0}', space=sflag, size = 0x4, scoped, tag = 'scoped memory for tpu_custom_call.1']
    %12 = vsyncpa [#allocation3], 0
    %13 = vsyncpa [#allocation4], 0
    %14 = vsyncpa [#allocation7], 0
    // Predicated region
    $region2: #{tpu_custom_call.1} parent=1 // pred_check
      _
    $region3: #{tpu_custom_call.1} parent=1 // pred_check_branch
      %16 = sbr.rel (0) target = $region5
    $region4: #{tpu_custom_call.1} parent=1 // pred_region
      _
    $region5: #{tpu_custom_call.1} parent=1 // pred_fallthru
      _
    // Predicated region
    $region6: #{tpu_custom_call.1} parent=1 // pred_check
      _
    $region7: #{tpu_custom_call.1} parent=1 // pred_check_branch
      %18 = sbr.rel (0) target = $region9
    $region8: #{tpu_custom_call.1} parent=1 // pred_region
      %s20 = ssub.s32 128, 128
      %21 = vsyncadd [#allocation3], %s20
      %s23 = sshll.u32 [#allocation2], 4
      %s24 = int_to_ptr.vmem [resolvable:$true] %s23
      %26 = dma.hbm_to_vmem [thread:$0]  %s1, 128, %s24, [#allocation3]
    $region9: #{tpu_custom_call.1} parent=1 // pred_fallthru
      _
    // Predicated region
    $region10: #{tpu_custom_call.1} parent=1 // pred_check
      _
    $region11: #{tpu_custom_call.1} parent=1 // pred_check_branch
      %28 = sbr.rel (0) target = $region13
    $region12: #{tpu_custom_call.1} parent=1 // pred_region
      _
    $region13: #{tpu_custom_call.1} parent=1 // pred_fallthru
      _
    // Predicated region
    $region14: #{tpu_custom_call.1} parent=1 // pred_check
      _
    $region15: #{tpu_custom_call.1} parent=1 // pred_check_branch
      %30 = sbr.rel (0) target = $region17
    $region16: #{tpu_custom_call.1} parent=1 // pred_region
      _
    $region17: #{tpu_custom_call.1} parent=1 // pred_fallthru
      _
    // Predicated region
    $region18: #{tpu_custom_call.1} parent=1 // pred_check
      _
    $region19: #{tpu_custom_call.1} parent=1 // pred_check_branch
      %32 = sbr.rel (0) target = $region21
    $region20: #{tpu_custom_call.1} parent=1 // pred_region
      _
    $region21: #{tpu_custom_call.1} parent=1 // pred_fallthru
      _
    // Predicated region
    $region22: #{tpu_custom_call.1} parent=1 // pred_check
      _
    $region23: #{tpu_custom_call.1} parent=1 // pred_check_branch
      %34 = sbr.rel (0) target = $region25
    $region24: #{tpu_custom_call.1} parent=1 // pred_region
      %35 = dma.done [#allocation3], 128
    $region25: #{tpu_custom_call.1} parent=1 // pred_fallthru
      _
    %p36 = scmp.eq.s32.totalorder 0, 0
    // Predicated region
    $region26: #{tpu_custom_call.1} parent=1 // pred_check
      %p37 = pneg %p36
    $region27: #{tpu_custom_call.1} parent=1 // pred_check_branch
      %39 = sbr.rel (%p37) target = $region29
    $region28: #{tpu_custom_call.1} parent=1 // pred_region
      %vm40 = vcmask 0
      %41 = vst.msk [vmem:[#allocation5] sm:$0x1] %vm40, 0.0
      %42 = vst.msk [vmem:[#allocation6] sm:$0x1] %vm40, 0.0
    $region29: #{tpu_custom_call.1} parent=1 // pred_fallthru
      _
    %v43 = vld [vmem:[%s0] sm:$0xff]
    %v44 = vld [vmem:[#allocation2] sm:$0xff]
    %v45 = vld [vmem:[%s2] sm:$0xff]
    %v46 = vld [vmem:[%s4] sm:$0x3]
    %v47 = vunpack.c.0.s8 %v46
    %v48 = vcvt.s32.f32 %v47
    %v49 = vld [vmem:[%s3] sm:$0xff]
    %v50 = vsub.f32 %v45, %v43
    %v51 = vmul.f32 %v50, %v48
    %v52 = vmul.f32 %v51, 1.442695
    %v53 = vpow.pop %v52
    %v54 = vsub.f32 %v53, %v51
    %v55 = vsub.f32 %v54, 1.0
    %v56 = vmul.f32 %v55, %v48
    %v57 = vsub.f32 %v43, %v44
    %v58 = vmul.f32 %v57, 1.442695
    %v59 = vpow.pop %v58
    %61 = vset.pattern.permute.xlu0 0
    %62 = vperm.xlu0 %61, %v49
    %v63 = vpop.permute.xlu0 %62
    %v65 = vmul.f32 %v59, %v63
    %v66 = vmax.f32 %v59, 0.8
    %v67 = vmin.f32 %v66, 1.2
    %v68 = vmul.f32 %v67, %v63
    %v69 = vmin.f32 %v65, %v68
    %v70 = vsub.f32 0.0, %v69
    %v71 = vmul.f32 %v70, %v48
    %vm72 = vcmask 64512
    %v73 = vsel %vm72, %v48, 0.0
    %74 = vadd.xlane.f32.xlu0 %v73
    %v75 = vpop.xlane.xlu0 %74
    %v76 = vadd.f32 %v75, 1e-10
    %v77 = vrcp.pop %v76
    %v78 = vmul.f32 1.0, %v77
    %v79 = vsel %vm72, %v56, 0.0
    %80 = vadd.xlane.f32.xlu0 %v79
    %v81 = vpop.xlane.xlu0 %80
    %v82 = vsel %vm72, %v71, 0.0
    %83 = vadd.xlane.f32.xlu0 %v82
    %v84 = vpop.xlane.xlu0 %83
    %v85 = vmul.f32 %v81, %v78
    %v86 = vmul.f32 %v81, 0.01
    %v87 = vadd.f32 %v84, %v86
    %v88 = vmul.f32 %v87, %v78
    %v89 = vld [vmem:[#allocation5] sm:$0x1]
    %v90 = vrot.slane %v88, 4
    %v91 = vadd.f32 %v88, %v90
    %v92 = vrot.slane %v91, 2
    %v93 = vadd.f32 %v91, %v92
    %v94 = vrot.slane %v93, 1
    %v95 = vadd.f32 %v93, %v94
    %v96 = vmul.f32 %v95, 0.5
    %v97 = vadd.f32 %v89, %v96
    %vm98 = vcmask 0
    %99 = vst.msk [vmem:[#allocation5] sm:$0x1] %vm98, %v97
    %v100 = vld [vmem:[#allocation6] sm:$0x1]
    %v101 = vrot.slane %v85, 4
    %v102 = vadd.f32 %v85, %v101
    %v103 = vrot.slane %v102, 2
    %v104 = vadd.f32 %v102, %v103
    %v105 = vrot.slane %v104, 1
    %v106 = vadd.f32 %v104, %v105
    %v107 = vmul.f32 %v106, 0.5
    %v108 = vadd.f32 %v100, %v107
    %109 = vst.msk [vmem:[#allocation6] sm:$0x1] %vm98, %v108
    // Predicated region
    $region30: #{tpu_custom_call.1} parent=1 // pred_check
      _
    $region31: #{tpu_custom_call.1} parent=1 // pred_check_branch
      %111 = sbr.rel (0) target = $region33
    $region32: #{tpu_custom_call.1} parent=1 // pred_region
      %s113 = ssub.s32 16, 16
      %114 = vsyncadd [#allocation4], %s113
      %s116 = sshll.u32 [#allocation5], 4
      %s117 = int_to_ptr.vmem [resolvable:$true] %s116
      %119 = dma.vmem_to_hbm [thread:$0]  %s117, 16, %s5, [#allocation4]
    $region33: #{tpu_custom_call.1} parent=1 // pred_fallthru
      _
    // Predicated region
    $region34: #{tpu_custom_call.1} parent=1 // pred_check
      _
    $region35: #{tpu_custom_call.1} parent=1 // pred_check_branch
      %121 = sbr.rel (0) target = $region37
    $region36: #{tpu_custom_call.1} parent=1 // pred_region
      %s123 = ssub.s32 16, 16
      %124 = vsyncadd [#allocation7], %s123
      %s126 = sshll.u32 [#allocation6], 4
      %s127 = int_to_ptr.vmem [resolvable:$true] %s126
      %129 = dma.vmem_to_hbm [thread:$0]  %s127, 16, %s6, [#allocation7]
    $region37: #{tpu_custom_call.1} parent=1 // pred_fallthru
      _
    // Predicated region
    $region38: #{tpu_custom_call.1} parent=1 // pred_check
      _
    $region39: #{tpu_custom_call.1} parent=1 // pred_check_branch
      %131 = sbr.rel (0) target = $region41
    $region40: #{tpu_custom_call.1} parent=1 // pred_region
      %132 = dma.done [#allocation4], 16
    $region41: #{tpu_custom_call.1} parent=1 // pred_fallthru
      _
    // Predicated region
    $region42: #{tpu_custom_call.1} parent=1 // pred_check
      _
    $region43: #{tpu_custom_call.1} parent=1 // pred_check_branch
      %134 = sbr.rel (0) target = $region45
    $region44: #{tpu_custom_call.1} parent=1 // pred_region
      %135 = dma.done [#allocation7], 16
    $region45: #{tpu_custom_call.1} parent=1 // pred_fallthru
      _
    %136 = vsyncpa [#allocation3], 1
    %137 = vsyncpa [#allocation4], 1
    %138 = vsyncpa [#allocation7], 1

</llo_original>
